<compile_context>
chip_gen: v5e
topology: v5e:2x2
jax: 0.10.0
libtpu: 0.0.40
codegen_flags: <defaults>
</compile_context>

<pallas_src>
import math

import jax
import jax.numpy as jnp
from jax.experimental import pallas as pl
from jax.experimental.pallas import tpu as pltpu

LN_EPS = 1e-5


# ---------------------------------------------------------------------------
# Kernels
# ---------------------------------------------------------------------------
def _layernorm_f32(x):
    """Two-pass (numerically stable) LayerNorm without affine; f32 math."""
    xf = x.astype(jnp.float32)
    mean = jnp.mean(xf, axis=-1, keepdims=True)
    centered = xf - mean
    var = jnp.mean(centered * centered, axis=-1, keepdims=True)
    return centered * jax.lax.rsqrt(var + LN_EPS)


def _kernel_resident(x_ref, w_ref, b_ref, o_ref):
    # x_ref: (TM, D) activation row tile
    # w_ref: (D, D)  folded weight, constant index_map -> DMA'd once, resident
    # b_ref: (1, D)  folded bias (f32)
    # o_ref: (TM, D) output tile
    xn = _layernorm_f32(x_ref[...])
    y = jnp.dot(xn.astype(w_ref.dtype), w_ref[...],
                preferred_element_type=jnp.float32)
    o_ref[...] = (y + b_ref[...]).astype(o_ref.dtype)


def _kernel_streamed(x_ref, w_ref, b_ref, o_ref, xn_ref):
    # x_ref:  (TM, D)  activation row tile (fetched once per row tile)
    # w_ref:  (D, TN)  folded weight column slice (streamed)
    # b_ref:  (1, TN)  folded bias slice (f32)
    # o_ref:  (TM, TN) output tile
    # xn_ref: (TM, D)  VMEM scratch holding LN(x) in the matmul operand dtype
    @pl.when(pl.program_id(1) == 0)
    def _():
        xn_ref[...] = _layernorm_f32(x_ref[...]).astype(xn_ref.dtype)

    y = jnp.dot(xn_ref[...], w_ref[...], preferred_element_type=jnp.float32)
    o_ref[...] = (y + b_ref[...]).astype(o_ref.dtype)


# ---------------------------------------------------------------------------
# Host-side helpers
# ---------------------------------------------------------------------------
def _round_up(n, m):
    return ((n + m - 1) // m) * m


def _pick_tn(D, max_tn=512):
    """Column-tile size: prefer multiples of 256 (v6e/v7x MXU is 2x256x256),
    then multiples of 128, among divisors of D."""
    if D <= max_tn:
        return D
    start = max_tn - (max_tn % 256)
    for tn in range(start, 255, -256):
        if D % tn == 0:
            return tn
    start = max_tn - (max_tn % 128)
    for tn in range(start, 127, -128):
        if D % tn == 0:
            return tn
    # TODO(synk): pad the N axis to a multiple of 256 (masked last tile) for
    # odd D instead of falling back to the full dimension.
    return D


def _vmem_budget_bytes(headroom_bytes=8 * 1024 * 1024):
    """Physical VMEM minus headroom (clamps v7x's 64 MiB correctly)."""
    try:
        cap = int(pltpu.get_tpu_info().vmem_capacity_bytes)
    except Exception:
        cap = 64 * 1024 * 1024  # conservative fallback (v7x per-TensorCore)
    return max(cap - headroom_bytes, 16 * 1024 * 1024)


def prepare_predictor_params(ln_gamma, ln_beta, lin_w, lin_b, *,
                             weight_dtype=jnp.bfloat16):
    """One-time parameter prep (hoisted out of the per-call hot path).

    * Transposes the PyTorch (out, in) weight to (in, out).
    * Folds LayerNorm gamma into the weight rows and beta into the bias
      (exact, done in f32) so the kernel only normalizes.
    * Casts the weight to bf16 by default (native MXU rate, f32 accumulation
      is preserved inside the kernel). Pass weight_dtype=None to keep f32.
    """
    gamma = jnp.asarray(ln_gamma, jnp.float32)
    beta = jnp.asarray(ln_beta, jnp.float32)
    w = jnp.asarray(lin_w, jnp.float32)          # (out, in) PyTorch layout
    b = jnp.asarray(lin_b, jnp.float32)
    w_t = w.T                                    # (in, out)
    w_fold = gamma[:, None] * w_t                # diag(gamma) @ W^T
    b_fold = beta @ w_t + b                      # beta @ W^T + b
    if weight_dtype is not None:
        w_fold = w_fold.astype(weight_dtype)
    return w_fold, b_fold.reshape(1, -1).astype(jnp.float32)


def predictor_forward(x, params, *, tile_m=None, max_tn=512,
                      force_streamed=False):
    """x: (..., D).  params: output of prepare_predictor_params()."""
    w_fold, bias2 = params
    orig_shape = x.shape
    D = orig_shape[-1]
    assert D % 128 == 0, "dim must be a multiple of 128 for lane tiling"
    assert w_fold.shape == (D, D)

    x2 = x.reshape(-1, D)
    M = x2.shape[0]
    x_item = jnp.dtype(x2.dtype).itemsize
    w_item = jnp.dtype(w_fold.dtype).itemsize
    row_align = 8 if x_item >= 4 else 16

    budget = _vmem_budget_bytes()

    def clamp_tm(target):
        t = min(target, _round_up(M, row_align))
        return max(row_align, _round_up(t, row_align))

    # ----- Path selection: resident weight if the full (D, D) fits VMEM -----
    # (weight counted double-buffered to stay conservative even though its
    #  constant index_map means it is only DMA'd once).
    tm_res = clamp_tm(tile_m if tile_m is not None else 256)
    resident_need = (2 * tm_res * D * x_item      # x tile (double-buffered)
                     + 2 * D * D * w_item         # weight (conservative 2x)
                     + 2 * tm_res * D * x_item    # out tile
                     + 2 * D * 4)                 # bias
    use_resident = (not force_streamed) and resident_need <= budget

    if use_resident:
        tm = tm_res
        Mp = _round_up(M, tm)
        if Mp != M:
            x2 = jnp.pad(x2, ((0, Mp - M), (0, 0)))
        grid = (Mp // tm,)
        vmem_need = resident_need
        w_traffic = D * D * w_item                # weight DMA'd exactly once

        grid_spec = pltpu.PrefetchScalarGridSpec(
            num_scalar_prefetch=0,
            grid=grid,
            in_specs=[
                pl.BlockSpec((tm, D), lambda i: (i, 0)),   # x row tile
                pl.BlockSpec((D, D), lambda i: (0, 0)),    # resident weight
                pl.BlockSpec((1, D), lambda i: (0, 0)),    # bias
            ],
            out_specs=pl.BlockSpec((tm, D), lambda i: (i, 0)),
        )
        kernel = _kernel_resident
        dim_sem = ("parallel",)
    else:
        # Streamed path: weight column tiles stream from HBM; LN result is
        # cached in VMEM scratch and reused across all column tiles.  Large
        # row tiles cut the weight re-read factor.
        tn = _pick_tn(D, max_tn)
        tm = clamp_tm(tile_m if tile_m is not None else 512)

        def streamed_need(t):
            return (2 * t * D * x_item        # x tile (double-buffered)
                    + 2 * D * tn * w_item     # weight slice (double-buffered)
                    + 2 * t * tn * x_item     # out tile
                    + t * D * w_item          # LN scratch (single buffer)
                    + 2 * tn * 4)             # bias slice

        while tm > row_align and streamed_need(tm) > budget:
            tm = max(row_align, _round_up(tm // 2, row_align))
        # TODO(synk): if even a single (D, tn) weight slice overflows VMEM
        # (very large D), add a K-axis reduction grid with a VMEM f32
        # accumulator and pl.when init/finalize.

        Mp = _round_up(M, tm)
        if Mp != M:
            x2 = jnp.pad(x2, ((0, Mp - M), (0, 0)))
        grid = (Mp // tm, D // tn)
        vmem_need = streamed_need(tm)
        w_traffic = (Mp // tm) * D * D * w_item   # weight re-streamed per row tile

        grid_spec = pltpu.PrefetchScalarGridSpec(
            num_scalar_prefetch=0,
            grid=grid,
            in_specs=[
                pl.BlockSpec((tm, D), lambda i, j: (i, 0)),   # x row tile
                pl.BlockSpec((D, tn), lambda i, j: (0, j)),   # weight slice
                pl.BlockSpec((1, tn), lambda i, j: (0, j)),   # bias slice
            ],
            out_specs=pl.BlockSpec((tm, tn), lambda i, j: (i, j)),
            scratch_shapes=[pltpu.VMEM((tm, D), w_fold.dtype)],  # cached LN(x)
        )
        kernel = _kernel_streamed
        # N axis must be sequential so the LN scratch carries across j tiles.
        dim_sem = ("parallel", "arbitrary")

    vmem_limit = int(min(budget,
                         max(32 * 1024 * 1024, vmem_need + 8 * 1024 * 1024)))

    cost = pl.CostEstimate(
        flops=2 * Mp * D * D,
        transcendentals=Mp,                       # one rsqrt per row
        bytes_accessed=(Mp * D * x_item           # read x (once per row tile)
                        + w_traffic               # actual weight traffic
                        + Mp * D * x_item         # write out
                        + D * 4))                 # bias

    out = pl.pallas_call(
        kernel,
        out_shape=jax.ShapeDtypeStruct((Mp, D), x.dtype),
        grid_spec=grid_spec,
        compiler_params=pltpu.CompilerParams(
            dimension_semantics=dim_sem,
            vmem_limit_bytes=vmem_limit),
        cost_estimate=cost,
    )(x2, w_fold, bias2)

    if Mp != M:
        out = out[:M]
    return out.reshape(orig_shape)


# ---------------------------------------------------------------------------
# Pure-JAX reference (PyTorch semantics) and demo
# ---------------------------------------------------------------------------
def reference_forward(x, ln_gamma, ln_beta, lin_w, lin_b):
    xf = x.astype(jnp.float32)
    mean = jnp.mean(xf, axis=-1, keepdims=True)
    var = jnp.mean((xf - mean) ** 2, axis=-1, keepdims=True)
    xn = (xf - mean) * jax.lax.rsqrt(var + LN_EPS)
    xn = xn * ln_gamma + ln_beta
    return (xn @ lin_w.T + lin_b).astype(x.dtype)


if __name__ == "__main__":
    # Small shapes consistent with the module: batch=2, seq=8, dim=256.
    B, S, D = 2, 8, 256
    key = jax.random.PRNGKey(0)
    kx, kw, kb, kg, kbt = jax.random.split(key, 5)

    x = jax.random.normal(kx, (B, S, D), dtype=jnp.float32)

    # Non-trivial LayerNorm affine params to exercise the gamma/beta fold.
    ln_gamma = 1.0 + 0.1 * jax.random.normal(kg, (D,), jnp.float32)
    ln_beta = 0.1 * jax.random.normal(kbt, (D,), jnp.float32)
    bound = 1.0 / math.sqrt(D)
    lin_w = jax.random.uniform(kw, (D, D), jnp.float32, -bound, bound)
    lin_b = jax.random.uniform(kb, (D,), jnp.float32, -bound, bound)

    ref = reference_forward(x, ln_gamma, ln_beta, lin_w, lin_b)

    # 1) f32 weights, VMEM-resident weight path (tight tolerance).
    params_f32 = prepare_predictor_params(ln_gamma, ln_beta, lin_w, lin_b,
                                          weight_dtype=None)
    out_f32 = jax.block_until_ready(predictor_forward(x, params_f32))
    assert out_f32.shape == (B, S, D)
    assert jnp.allclose(out_f32, ref, atol=2e-3, rtol=2e-3), \
        "f32 resident path mismatch vs reference"

    # 2) bf16 weights (default; native MXU rate, f32 accumulation), resident.
    params_bf16 = prepare_predictor_params(ln_gamma, ln_beta, lin_w, lin_b)
    out_bf16 = jax.block_until_ready(predictor_forward(x, params_bf16))
    assert jnp.allclose(out_bf16, ref, atol=3e-2, rtol=3e-2), \
        "bf16 resident path mismatch vs reference"

    # 3) Streamed path (weight column tiles + LN cached in VMEM scratch),
    #    forced here since D=256 would normally take the resident path.
    out_stream = jax.block_until_ready(
        predictor_forward(x, params_bf16, force_streamed=True, max_tn=128))
    assert jnp.allclose(out_stream, ref, atol=3e-2, rtol=3e-2), \
        "streamed path mismatch vs reference"

    print("KERNEL_OK")
</pallas_src>

<mosaic_0001>
module attributes {stable_mosaic.version = 11 : i64} {
  func.func @_kernel_resident(%arg0: i32, %arg1: memref<16x256xf32, #tpu.memory_space<vmem>>, %arg2: memref<256x256xf32, #tpu.memory_space<vmem>>, %arg3: memref<1x256xf32, #tpu.memory_space<vmem>>, %arg4: memref<16x256xf32, #tpu.memory_space<vmem>>) attributes {dimension_semantics = [#tpu.dimension_semantics<parallel>], iteration_bounds = array<i64: 1>, scalar_prefetch = 0 : i64, scratch_operands = 0 : i64, tpu.core_type = #tpu.core_type<tc>, window_params = [{transform_indices = @transform_0, window_bounds = array<i64: 16, 256>}, {pipeline_mode = #tpu.pipeline_mode<synchronous>, transform_indices = @transform_1, window_bounds = array<i64: 256, 256>}, {pipeline_mode = #tpu.pipeline_mode<synchronous>, transform_indices = @transform_2, window_bounds = array<i64: 1, 256>}, {transform_indices = @transform_3, window_bounds = array<i64: 16, 256>}]} {
    %c0 = arith.constant 0 : index
    %c0_0 = arith.constant 0 : index
    %0 = vector.load %arg1[%c0, %c0_0] : memref<16x256xf32, #tpu.memory_space<vmem>>, vector<16x256xf32>
    %cst = arith.constant dense<0.000000e+00> : vector<16xf32>
    %1 = vector.multi_reduction <add>, %0, %cst [1] : vector<16x256xf32> to vector<16xf32>
    %2 = vector.shape_cast %1 : vector<16xf32> to vector<16x1xf32>
    %cst_1 = arith.constant 2.560000e+02 : f32
    %3 = vector.broadcast %cst_1 : f32 to vector<16x1xf32>
    %4 = arith.divf %2, %3 : vector<16x1xf32>
    %5 = vector.broadcast %4 : vector<16x1xf32> to vector<16x256xf32>
    %6 = arith.subf %0, %5 : vector<16x256xf32>
    %7 = arith.mulf %6, %6 : vector<16x256xf32>
    %cst_2 = arith.constant dense<0.000000e+00> : vector<16xf32>
    %8 = vector.multi_reduction <add>, %7, %cst_2 [1] : vector<16x256xf32> to vector<16xf32>
    %9 = vector.shape_cast %8 : vector<16xf32> to vector<16x1xf32>
    %cst_3 = arith.constant 2.560000e+02 : f32
    %10 = vector.broadcast %cst_3 : f32 to vector<16x1xf32>
    %11 = arith.divf %9, %10 : vector<16x1xf32>
    %cst_4 = arith.constant 9.99999974E-6 : f32
    %12 = vector.broadcast %cst_4 : f32 to vector<16x1xf32>
    %13 = arith.addf %11, %12 : vector<16x1xf32>
    %14 = math.rsqrt %13 : vector<16x1xf32>
    %15 = vector.broadcast %14 : vector<16x1xf32> to vector<16x256xf32>
    %16 = arith.mulf %6, %15 : vector<16x256xf32>
    %c0_5 = arith.constant 0 : index
    %c0_6 = arith.constant 0 : index
    %17 = vector.load %arg2[%c0_5, %c0_6] : memref<256x256xf32, #tpu.memory_space<vmem>>, vector<256x256xf32>
    %cst_7 = arith.constant dense<0.000000e+00> : vector<16x256xf32>
    %18 = tpu.matmul %16, %17, %cst_7 {dimension_numbers = #tpu.dot_dimension_numbers<[1], [0], [0], [1], [0, 0, 1, 1], [], []>} : vector<16x256xf32>, vector<256x256xf32>, vector<16x256xf32> -> vector<16x256xf32>
    %c0_8 = arith.constant 0 : index
    %c0_9 = arith.constant 0 : index
    %19 = vector.load %arg3[%c0_8, %c0_9] : memref<1x256xf32, #tpu.memory_space<vmem>>, vector<1x256xf32>
    %20 = vector.broadcast %19 : vector<1x256xf32> to vector<16x256xf32>
    %21 = arith.addf %18, %20 : vector<16x256xf32>
    %c0_10 = arith.constant 0 : index
    %c0_11 = arith.constant 0 : index
    %22 = vector.load %arg4[%c0_10, %c0_11] : memref<16x256xf32, #tpu.memory_space<vmem>>, vector<16x256xf32>
    tpu.vector_store %arg4[%c0_10, %c0_11], %21 {strides = array<i32>} : memref<16x256xf32, #tpu.memory_space<vmem>>, vector<16x256xf32>,
    return
  }
  func.func @transform_0(%arg0: i32) -> (i32, i32) {
    %c0_i32 = arith.constant 0 : i32
    %c0_i32_0 = arith.constant 0 : i32
    return %arg0, %c0_i32 : i32, i32
  }
  func.func @transform_1(%arg0: i32) -> (i32, i32) {
    %c0_i32 = arith.constant 0 : i32
    %c0_i32_0 = arith.constant 0 : i32
    %c0_i32_1 = arith.constant 0 : i32
    return %c0_i32, %c0_i32_0 : i32, i32
  }
  func.func @transform_2(%arg0: i32) -> (i32, i32) {
    %c0_i32 = arith.constant 0 : i32
    %c0_i32_0 = arith.constant 0 : i32
    %c0_i32_1 = arith.constant 0 : i32
    return %c0_i32, %c0_i32_0 : i32, i32
  }
  func.func @transform_3(%arg0: i32) -> (i32, i32) {
    %c0_i32 = arith.constant 0 : i32
    %c0_i32_0 = arith.constant 0 : i32
    return %arg0, %c0_i32 : i32, i32
  }
}

</mosaic_0001>

<llo_original>
// kernel: tpu_custom_call.1
$region0: #{tpu_custom_call.1}
  #allocation0 [shape = 'u32[]', space=smem, size = 0x4, offset = 0x4, fixed_abs, tag = 'smem constant byte address 0x4 - core index']
  #allocation1 [shape = 'u32[72,128]{1,0:T(1,128)}', space=vmem, size = 0x9000, scoped, tag = 'internal scratch']
  %s0 = inlined_call_operand.hbm [shape: f32[16,256], index: 0, kind: input, shape index: {}]
  %s1 = inlined_call_operand.hbm [shape: f32[256,256], index: 1, kind: input, shape index: {}]
  %s2 = inlined_call_operand.hbm [shape: f32[1,256], index: 2, kind: input, shape index: {}]
  %s3 = inlined_call_operand.hbm [shape: f32[16,256], index: 3, kind: output, shape index: {}]
  %s4 = sld [smem:[#allocation0]]
  $region34: #{tpu_custom_call.1} parent=0
    _
  %s6 = ssub.s32 1, %s4
  %s7 = scalar_select 0, %s6, %s4
  $region1: #{tpu_custom_call.1} parent=0
    #allocation2 [shape = 'u8[16384]{0}', space=vmem, size = 0x4000, scoped, tag = 'input window, operand 0, single buffered']
    #allocation3 [shape = 's32[1]{0}', space=sflag, size = 0x4, scoped, tag = 'scoped memory for tpu_custom_call.1']
    #allocation4 [shape = 's32[1]{0}', space=sflag, size = 0x4, scoped, tag = 'scoped memory for tpu_custom_call.1']
    #allocation5 [shape = 'u8[262144]{0}', space=vmem, size = 0x40000, scoped, tag = 'input window, operand 1, single buffered']
    #allocation6 [shape = 's32[1]{0}', space=sflag, size = 0x4, scoped, tag = 'scoped memory for tpu_custom_call.1']
    #allocation7 [shape = 'u8[1024]{0}', space=vmem, size = 0x400, scoped, tag = 'input window, operand 2, single buffered']
    #allocation8 [shape = 'u8[16384]{0}', space=vmem, size = 0x4000, scoped, tag = 'output window, operand 0, single buffered']
    %8 = vsyncpa [#allocation3], 0
    %9 = vsyncpa [#allocation6], 0
    %10 = vsyncpa [#allocation4], 0
    // Predicated region
    $region2: #{tpu_custom_call.1} parent=1 // pred_check
      _
    $region3: #{tpu_custom_call.1} parent=1 // pred_check_branch
      %12 = sbr.rel (0) target = $region5
    $region4: #{tpu_custom_call.1} parent=1 // pred_region
      %14 = vsyncadd [#allocation3], 0
      %s15 = sshll.u32 %s0, 4
      %s16 = int_to_ptr.hbm [resolvable:$true] %s15
      %s17 = sshll.u32 [#allocation2], 4
      %s18 = int_to_ptr.vmem [resolvable:$true] %s17
      %23 = dma.hbm_to_vmem [thread:$0]  %s16, 512, %s18, [#allocation3], 256, 256, 16
    $region5: #{tpu_custom_call.1} parent=1 // pred_fallthru
      _
    // Predicated region
    $region6: #{tpu_custom_call.1} parent=1 // pred_check
      _
    $region7: #{tpu_custom_call.1} parent=1 // pred_check_branch
      %25 = sbr.rel (0) target = $region9
    $region8: #{tpu_custom_call.1} parent=1 // pred_region
      %27 = vsyncadd [#allocation6], 0
      %s28 = sshll.u32 %s1, 4
      %s29 = int_to_ptr.hbm [resolvable:$true] %s28
      %s30 = sshll.u32 [#allocation5], 4
      %s31 = int_to_ptr.vmem [resolvable:$true] %s30
      %36 = dma.hbm_to_vmem [thread:$0]  %s29, 8192, %s31, [#allocation6], 256, 256, 16
    $region9: #{tpu_custom_call.1} parent=1 // pred_fallthru
      _
    // Predicated region
    $region10: #{tpu_custom_call.1} parent=1 // pred_check
      _
    $region11: #{tpu_custom_call.1} parent=1 // pred_check_branch
      %38 = sbr.rel (0) target = $region13
    $region12: #{tpu_custom_call.1} parent=1 // pred_region
      %40 = vsyncadd [#allocation6], 0
      %s42 = sshll.u32 %s2, 4
      %s43 = int_to_ptr.hbm [resolvable:$true] %s42
      %s44 = sshll.u32 [#allocation7], 4
      %s45 = int_to_ptr.vmem [resolvable:$true] %s44
      %47 = dma.hbm_to_vmem [thread:$0]  %s43, 32, %s45, [#allocation6]
    $region13: #{tpu_custom_call.1} parent=1 // pred_fallthru
      _
    // Predicated region
    $region14: #{tpu_custom_call.1} parent=1 // pred_check
      _
    $region15: #{tpu_custom_call.1} parent=1 // pred_check_branch
      %49 = sbr.rel (0) target = $region17
    $region16: #{tpu_custom_call.1} parent=1 // pred_region
      %51 = dma.done [#allocation3], 512
    $region17: #{tpu_custom_call.1} parent=1 // pred_fallthru
      _
    // Predicated region
    $region18: #{tpu_custom_call.1} parent=1 // pred_check
      _
    $region19: #{tpu_custom_call.1} parent=1 // pred_check_branch
      %53 = sbr.rel (0) target = $region21
    $region20: #{tpu_custom_call.1} parent=1 // pred_region
      %55 = dma.done [#allocation6], 8192
    $region21: #{tpu_custom_call.1} parent=1 // pred_fallthru
      _
    // Predicated region
    $region22: #{tpu_custom_call.1} parent=1 // pred_check
      _
    $region23: #{tpu_custom_call.1} parent=1 // pred_check_branch
      %57 = sbr.rel (0) target = $region25
    $region24: #{tpu_custom_call.1} parent=1 // pred_region
      %59 = dma.done [#allocation6], 32
    $region25: #{tpu_custom_call.1} parent=1 // pred_fallthru
      _
    %v60 = vld [vmem:[#allocation2] sm:$0xff]
    %v61 = vld [vmem:[#allocation2 + $0x8] sm:$0xff]
    %v62 = vld [vmem:[#allocation2 + $0x10] sm:$0xff]
    %v63 = vld [vmem:[#allocation2 + $0x18] sm:$0xff]
    %v64 = vadd.f32 %v60, %v61
    %65 = vadd.xlane.f32.xlu0 %v64
    %v66 = vpop.xlane.xlu0 %65
    %v67 = vadd.f32 %v62, %v63
    %68 = vadd.xlane.f32.xlu0 %v67
    %v69 = vpop.xlane.xlu0 %68
    %v70 = vrcp.pop 256.0
    %v71 = vmul.f32 256.0, %v70
    %v72 = vsub.f32 1.0, %v71
    %v73 = vmul.f32 %v70, %v72
    %v74 = vadd.f32 %v70, %v73
    %vm75 = vweird.f32 %v70
    %v76 = vsel %vm75, %v70, %v74
    %v77 = vmul.f32 %v66, %v76
    %v78 = vmul.f32 %v69, %v76
    %v79 = vsub.f32 %v60, %v77
    %v80 = vsub.f32 %v61, %v77
    %v81 = vsub.f32 %v62, %v78
    %v82 = vsub.f32 %v63, %v78
    %v83 = vmul.f32 %v79, %v79
    %v84 = vmul.f32 %v80, %v80
    %v85 = vmul.f32 %v81, %v81
    %v86 = vmul.f32 %v82, %v82
    %v87 = vadd.f32 %v83, %v84
    %88 = vadd.xlane.f32.xlu0 %v87
    %v89 = vpop.xlane.xlu0 %88
    %v90 = vadd.f32 %v85, %v86
    %91 = vadd.xlane.f32.xlu0 %v90
    %v92 = vpop.xlane.xlu0 %91
    %v93 = vmul.f32 %v89, %v76
    %v94 = vmul.f32 %v92, %v76
    %v95 = vadd.f32 %v93, 1e-05
    %v96 = vadd.f32 %v94, 1e-05
    %v97 = vrsqrt.pop %v95
    %v98 = vmul.f32 %v97, %v95
    %v99 = vmul.f32 %v98, %v97
    %v100 = vmul.f32 0.5, %v99
    %v101 = vsub.f32 1.5, %v100
    %v102 = vmul.f32 %v97, %v101
    %vm103 = vweird.f32 %v95
    %vm104 = vweird.f32 %v97
    %vm105 = vmor %vm103, %vm104
    %v106 = vsel %vm105, %v97, %v102
    %v107 = vrsqrt.pop %v96
    %v108 = vmul.f32 %v107, %v96
    %v109 = vmul.f32 %v108, %v107
    %v110 = vmul.f32 0.5, %v109
    %v111 = vsub.f32 1.5, %v110
    %v112 = vmul.f32 %v107, %v111
    %vm113 = vweird.f32 %v96
    %vm114 = vweird.f32 %v107
    %vm115 = vmor %vm113, %vm114
    %v116 = vsel %vm115, %v107, %v112
    %v117 = vmul.f32 %v79, %v106
    %v118 = vmul.f32 %v80, %v106
    %v119 = vmul.f32 %v81, %v116
    %v120 = vmul.f32 %v82, %v116
    %v121 = vld [vmem:[#allocation5] sm:$0xff]
    %v122 = vld [vmem:[#allocation5 + $0x8] sm:$0xff]
    %v123 = vld [vmem:[#allocation5 + $0x10] sm:$0xff]
    %v124 = vld [vmem:[#allocation5 + $0x18] sm:$0xff]
    %v125 = vld [vmem:[#allocation5 + $0x20] sm:$0xff]
    %v126 = vld [vmem:[#allocation5 + $0x28] sm:$0xff]
    %v127 = vld [vmem:[#allocation5 + $0x30] sm:$0xff]
    %v128 = vld [vmem:[#allocation5 + $0x38] sm:$0xff]
    %v129 = vld [vmem:[#allocation5 + $0x40] sm:$0xff]
    %v130 = vld [vmem:[#allocation5 + $0x48] sm:$0xff]
    %v131 = vld [vmem:[#allocation5 + $0x50] sm:$0xff]
    %v132 = vld [vmem:[#allocation5 + $0x58] sm:$0xff]
    %v133 = vld [vmem:[#allocation5 + $0x60] sm:$0xff]
    %v134 = vld [vmem:[#allocation5 + $0x68] sm:$0xff]
    %v135 = vld [vmem:[#allocation5 + $0x70] sm:$0xff]
    %v136 = vld [vmem:[#allocation5 + $0x78] sm:$0xff]
    %v137 = vld [vmem:[#allocation5 + $0x80] sm:$0xff]
    %v138 = vld [vmem:[#allocation5 + $0x88] sm:$0xff]
    %v139 = vld [vmem:[#allocation5 + $0x90] sm:$0xff]
    %v140 = vld [vmem:[#allocation5 + $0x98] sm:$0xff]
    %v141 = vld [vmem:[#allocation5 + $0xa0] sm:$0xff]
    %v142 = vld [vmem:[#allocation5 + $0xa8] sm:$0xff]
    %v143 = vld [vmem:[#allocation5 + $0xb0] sm:$0xff]
    %v144 = vld [vmem:[#allocation5 + $0xb8] sm:$0xff]
    %v145 = vld [vmem:[#allocation5 + $0xc0] sm:$0xff]
    %v146 = vld [vmem:[#allocation5 + $0xc8] sm:$0xff]
    %v147 = vld [vmem:[#allocation5 + $0xd0] sm:$0xff]
    %v148 = vld [vmem:[#allocation5 + $0xd8] sm:$0xff]
    %v149 = vld [vmem:[#allocation5 + $0xe0] sm:$0xff]
    %v150 = vld [vmem:[#allocation5 + $0xe8] sm:$0xff]
    %v151 = vld [vmem:[#allocation5 + $0xf0] sm:$0xff]
    %v152 = vld [vmem:[#allocation5 + $0xf8] sm:$0xff]
    %v153 = vld [vmem:[#allocation5 + $0x100] sm:$0xff]
    %v154 = vld [vmem:[#allocation5 + $0x108] sm:$0xff]
    %v155 = vld [vmem:[#allocation5 + $0x110] sm:$0xff]
    %v156 = vld [vmem:[#allocation5 + $0x118] sm:$0xff]
    %v157 = vld [vmem:[#allocation5 + $0x120] sm:$0xff]
    %v158 = vld [vmem:[#allocation5 + $0x128] sm:$0xff]
    %v159 = vld [vmem:[#allocation5 + $0x130] sm:$0xff]
    %v160 = vld [vmem:[#allocation5 + $0x138] sm:$0xff]
    %v161 = vld [vmem:[#allocation5 + $0x140] sm:$0xff]
    %v162 = vld [vmem:[#allocation5 + $0x148] sm:$0xff]
    %v163 = vld [vmem:[#allocation5 + $0x150] sm:$0xff]
    %v164 = vld [vmem:[#allocation5 + $0x158] sm:$0xff]
    %v165 = vld [vmem:[#allocation5 + $0x160] sm:$0xff]
    %v166 = vld [vmem:[#allocation5 + $0x168] sm:$0xff]
    %v167 = vld [vmem:[#allocation5 + $0x170] sm:$0xff]
    %v168 = vld [vmem:[#allocation5 + $0x178] sm:$0xff]
    %v169 = vld [vmem:[#allocation5 + $0x180] sm:$0xff]
    %v170 = vld [vmem:[#allocation5 + $0x188] sm:$0xff]
    %v171 = vld [vmem:[#allocation5 + $0x190] sm:$0xff]
    %v172 = vld [vmem:[#allocation5 + $0x198] sm:$0xff]
    %v173 = vld [vmem:[#allocation5 + $0x1a0] sm:$0xff]
    %v174 = vld [vmem:[#allocation5 + $0x1a8] sm:$0xff]
    %v175 = vld [vmem:[#allocation5 + $0x1b0] sm:$0xff]
    %v176 = vld [vmem:[#allocation5 + $0x1b8] sm:$0xff]
    %v177 = vld [vmem:[#allocation5 + $0x1c0] sm:$0xff]
    %v178 = vld [vmem:[#allocation5 + $0x1c8] sm:$0xff]
    %v179 = vld [vmem:[#allocation5 + $0x1d0] sm:$0xff]
    %v180 = vld [vmem:[#allocation5 + $0x1d8] sm:$0xff]
    %v181 = vld [vmem:[#allocation5 + $0x1e0] sm:$0xff]
    %v182 = vld [vmem:[#allocation5 + $0x1e8] sm:$0xff]
    %v183 = vld [vmem:[#allocation5 + $0x1f0] sm:$0xff]
    %v184 = vld [vmem:[#allocation5 + $0x1f8] sm:$0xff]
    %v185 = vld [vmem:[#allocation7] sm:$0x3]
    %v187 = vperm.slane %v185, 0
    %v188 = vperm.slane %v185, 1
    %191 = vmatpush.msra.mxu0 %v151
    %192 = vmatpush.msra.mxu0 %v149
    %193 = vmatpush.msra.mxu0 %v147
    %194 = vmatpush.msra.mxu0 %v145
    %195 = vmatpush.msra.mxu0 %v143
    %196 = vmatpush.msra.mxu0 %v141
    %197 = vmatpush.msra.mxu0 %v139
    %198 = vmatpush.msra.mxu0 %v137
    %199 = vmatpush.msra.mxu0 %v135
    %200 = vmatpush.msra.mxu0 %v133
    %201 = vmatpush.msra.mxu0 %v131
    %202 = vmatpush.msra.mxu0 %v129
    %203 = vmatpush.msra.mxu0 %v127
    %204 = vmatpush.msra.mxu0 %v125
    %205 = vmatpush.msra.mxu0 %v123
    %206 = vmatpush.msra.mxu0 %v121
    %207 = vmatmul.f32.gmra.mxu0 %v117
    %v208 = vpop.f32.mrf.mxu0
    %v209 = vadd.f32 %v187, %v208
    %210 = vmatmul.f32.gmra.mxu0 %v119
    %v211 = vpop.f32.mrf.mxu0
    %v212 = vadd.f32 %v187, %v211
    %213 = vdwg.mxu0
    %214 = vmatpush.msra.mxu0 %v183
    %215 = vmatpush.msra.mxu0 %v181
    %216 = vmatpush.msra.mxu0 %v179
    %217 = vmatpush.msra.mxu0 %v177
    %218 = vmatpush.msra.mxu0 %v175
    %219 = vmatpush.msra.mxu0 %v173
    %220 = vmatpush.msra.mxu0 %v171
    %221 = vmatpush.msra.mxu0 %v169
    %222 = vmatpush.msra.mxu0 %v167
    %223 = vmatpush.msra.mxu0 %v165
    %224 = vmatpush.msra.mxu0 %v163
    %225 = vmatpush.msra.mxu0 %v161
    %226 = vmatpush.msra.mxu0 %v159
    %227 = vmatpush.msra.mxu0 %v157
    %228 = vmatpush.msra.mxu0 %v155
    %229 = vmatpush.msra.mxu0 %v153
    %230 = vmatmul.f32.gmra.mxu0 %v118
    %v231 = vpop.f32.mrf.mxu0
    %v232 = vadd.f32 %v209, %v231
    %233 = vmatmul.f32.gmra.mxu0 %v120
    %v234 = vpop.f32.mrf.mxu0
    %v235 = vadd.f32 %v212, %v234
    %236 = vdwg.mxu0
    %237 = vmatpush.msra.mxu0 %v152
    %238 = vmatpush.msra.mxu0 %v150
    %239 = vmatpush.msra.mxu0 %v148
    %240 = vmatpush.msra.mxu0 %v146
    %241 = vmatpush.msra.mxu0 %v144
    %242 = vmatpush.msra.mxu0 %v142
    %243 = vmatpush.msra.mxu0 %v140
    %244 = vmatpush.msra.mxu0 %v138
    %245 = vmatpush.msra.mxu0 %v136
    %246 = vmatpush.msra.mxu0 %v134
    %247 = vmatpush.msra.mxu0 %v132
    %248 = vmatpush.msra.mxu0 %v130
    %249 = vmatpush.msra.mxu0 %v128
    %250 = vmatpush.msra.mxu0 %v126
    %251 = vmatpush.msra.mxu0 %v124
    %252 = vmatpush.msra.mxu0 %v122
    %253 = vmatmul.f32.gmra.mxu0 %v117
    %v254 = vpop.f32.mrf.mxu0
    %v255 = vadd.f32 %v188, %v254
    %256 = vmatmul.f32.gmra.mxu0 %v119
    %v257 = vpop.f32.mrf.mxu0
    %v258 = vadd.f32 %v188, %v257
    %259 = vdwg.mxu0
    %260 = vmatpush.msra.mxu0 %v184
    %261 = vmatpush.msra.mxu0 %v182
    %262 = vmatpush.msra.mxu0 %v180
    %263 = vmatpush.msra.mxu0 %v178
    %264 = vmatpush.msra.mxu0 %v176
    %265 = vmatpush.msra.mxu0 %v174
    %266 = vmatpush.msra.mxu0 %v172
    %267 = vmatpush.msra.mxu0 %v170
    %268 = vmatpush.msra.mxu0 %v168
    %269 = vmatpush.msra.mxu0 %v166
    %270 = vmatpush.msra.mxu0 %v164
    %271 = vmatpush.msra.mxu0 %v162
    %272 = vmatpush.msra.mxu0 %v160
    %273 = vmatpush.msra.mxu0 %v158
    %274 = vmatpush.msra.mxu0 %v156
    %275 = vmatpush.msra.mxu0 %v154
    %276 = vmatmul.f32.gmra.mxu0 %v118
    %v277 = vpop.f32.mrf.mxu0
    %v278 = vadd.f32 %v255, %v277
    %279 = vmatmul.f32.gmra.mxu0 %v120
    %v280 = vpop.f32.mrf.mxu0
    %v281 = vadd.f32 %v258, %v280
    %282 = vdwg.mxu0
    %283 = vst [vmem:[#allocation8] sm:$0xff] %v232
    %284 = vst [vmem:[#allocation8 + $0x8] sm:$0xff] %v278
    %285 = vst [vmem:[#allocation8 + $0x10] sm:$0xff] %v235
    %286 = vst [vmem:[#allocation8 + $0x18] sm:$0xff] %v281
    // Predicated region
    $region26: #{tpu_custom_call.1} parent=1 // pred_check
      _
    $region27: #{tpu_custom_call.1} parent=1 // pred_check_branch
      %288 = sbr.rel (0) target = $region29
    $region28: #{tpu_custom_call.1} parent=1 // pred_region
      %290 = vsyncadd [#allocation4], 0
      %s291 = sshll.u32 [#allocation8], 4
      %s292 = int_to_ptr.vmem [resolvable:$true] %s291
      %s293 = sshll.u32 %s3, 4
      %s294 = int_to_ptr.hbm [resolvable:$true] %s293
      %299 = dma.vmem_to_hbm [thread:$0]  %s292, 512, %s294, [#allocation4], 256, 256, 16
    $region29: #{tpu_custom_call.1} parent=1 // pred_fallthru
      _
    // Predicated region
    $region30: #{tpu_custom_call.1} parent=1 // pred_check
      _
    $region31: #{tpu_custom_call.1} parent=1 // pred_check_branch
      %301 = sbr.rel (0) target = $region33
    $region32: #{tpu_custom_call.1} parent=1 // pred_region
      %303 = dma.done [#allocation4], 512
    $region33: #{tpu_custom_call.1} parent=1 // pred_fallthru
      _
    %304 = vsyncpa [#allocation3], 1
    %305 = vsyncpa [#allocation6], 1
    %306 = vsyncpa [#allocation4], 1

</llo_original>
